<compile_context>
chip_gen: v7x
topology: tpu7x:2x2x1
jax: 0.10.0
libtpu: 0.0.40
codegen_flags: <defaults>
</compile_context>

<pallas_src>
import math
from functools import partial

import numpy as np

import jax
import jax.numpy as jnp
from jax.experimental import pallas as pl
from jax.experimental.pallas import tpu as pltpu

# ----------------- RoIHeads / sub-module hyper-parameters -------------------
NUM_CLASSES = 5                  # including background (class 0)
REPRESENTATION_SIZE = 32         # TwoMLPHead hidden size
POOL_SIZE = 7                    # MultiScaleRoIAlign output_size
SAMPLING_RATIO = 2
BBOX_REG_WEIGHTS = (10.0, 10.0, 5.0, 5.0)
BBOX_XFORM_CLIP = math.log(1000.0 / 16.0)
SCORE_THRESH = 0.05
NMS_THRESH = 0.5
DETECTIONS_PER_IMG = 10

LARGE_R_TILE = 512               # RoI tile rows for the large-R grid path


def _round_up(x, m):
    return ((x + m - 1) // m) * m


# ========================= Fused Pallas kernel ===============================
# fc6+ReLU -> fc7+ReLU -> (cls_score | bbox_pred) -> BoxCoder.decode + clip +
# softmax, all on one VMEM-resident RoI tile.  Output layout (lane-dense, 128):
#   [:, 0:K]      softmax scores
#   [:, K:2K]     x1 per class      (clipped to image)
#   [:, 2K:3K]    y1 per class
#   [:, 3K:4K]    x2 per class
#   [:, 4K:5K]    y2 per class
#   [:, 5K:]      zeros
def _fused_head_decode_kernel(x_ref, roi_ref, w6_ref, b6_ref, w7_ref, b7_ref,
                              wcb_ref, bcb_ref, out_ref):
    k = NUM_CLASSES

    # --- TwoMLPHead + FastRCNNPredictor (bf16 operands, f32 accumulation) ----
    x = x_ref[...]                                                    # [TR, IN_PAD] bf16
    h = jnp.dot(x, w6_ref[...], preferred_element_type=jnp.float32) + b6_ref[...]
    h = jnp.maximum(h, 0.0).astype(jnp.bfloat16)                      # fc6 + ReLU
    h = jnp.dot(h, w7_ref[...], preferred_element_type=jnp.float32) + b7_ref[...]
    h = jnp.maximum(h, 0.0).astype(jnp.bfloat16)                      # fc7 + ReLU
    z = jnp.dot(h, wcb_ref[...], preferred_element_type=jnp.float32) + bcb_ref[...]
    # z columns: [0:K] cls logits, [K:5K] bbox deltas (coordinate-major), f32.

    # --- softmax over class logits (reciprocal on the EUP slot) --------------
    logits = z[:, 0:k]
    m = jnp.max(logits, axis=-1, keepdims=True)
    e = jnp.exp(logits - m)
    scores = e * pl.reciprocal(jnp.sum(e, axis=-1, keepdims=True), approx=True)

    # --- BoxCoder.decode + clip_boxes_to_image -------------------------------
    roi = roi_ref[...]                                                # [TR, 8] f32
    px1 = roi[:, 0:1]
    py1 = roi[:, 1:2]
    px2 = roi[:, 2:3]
    py2 = roi[:, 3:4]
    img_h = roi[:, 4:5]
    img_w = roi[:, 5:6]

    widths = px2 - px1
    heights = py2 - py1
    ctr_x = px1 + 0.5 * widths
    ctr_y = py1 + 0.5 * heights

    wx, wy, ww, wh = BBOX_REG_WEIGHTS
    dx = z[:, k:2 * k] / wx                                           # [TR, K]
    dy = z[:, 2 * k:3 * k] / wy
    dw = jnp.minimum(z[:, 3 * k:4 * k] / ww, BBOX_XFORM_CLIP)
    dh = jnp.minimum(z[:, 4 * k:5 * k] / wh, BBOX_XFORM_CLIP)

    pred_ctr_x = dx * widths + ctr_x                                  # broadcast [TR,1]
    pred_ctr_y = dy * heights + ctr_y
    pred_w = jnp.exp(dw) * widths
    pred_h = jnp.exp(dh) * heights

    x1 = jnp.clip(pred_ctr_x - 0.5 * pred_w, 0.0, img_w)
    y1 = jnp.clip(pred_ctr_y - 0.5 * pred_h, 0.0, img_h)
    x2 = jnp.clip(pred_ctr_x + 0.5 * pred_w, 0.0, img_w)
    y2 = jnp.clip(pred_ctr_y + 0.5 * pred_h, 0.0, img_h)

    # One full-tile zero store, then cheap static sub-slice stores — no concat,
    # no lane shuffle; the output DMA writes the whole lane-dense tile anyway.
    out_ref[...] = jnp.zeros_like(out_ref)
    out_ref[:, 0:k] = scores
    out_ref[:, k:2 * k] = x1
    out_ref[:, 2 * k:3 * k] = y1
    out_ref[:, 3 * k:4 * k] = x2
    out_ref[:, 4 * k:5 * k] = y2


def run_fused_head(x_pad, roi_ext, kp, tile_r):
    r_pad, in_pad = x_pad.shape
    h_pad = kp["w6"].shape[1]
    out_pad = kp["wcb"].shape[1]
    grid = (r_pad // tile_r,)
    return pl.pallas_call(
        _fused_head_decode_kernel,
        out_shape=jax.ShapeDtypeStruct((r_pad, out_pad), jnp.float32),
        grid_spec=pltpu.PrefetchScalarGridSpec(
            num_scalar_prefetch=0,
            grid=grid,
            in_specs=[
                pl.BlockSpec((tile_r, in_pad), lambda i: (i, 0)),   # pooled feats (bf16)
                pl.BlockSpec((tile_r, 8), lambda i: (i, 0)),        # rois + img h/w (f32)
                pl.BlockSpec((in_pad, h_pad), lambda i: (0, 0)),    # w6 (resident, bf16)
                pl.BlockSpec((1, h_pad), lambda i: (0, 0)),         # b6 (f32)
                pl.BlockSpec((h_pad, h_pad), lambda i: (0, 0)),     # w7 (bf16)
                pl.BlockSpec((1, h_pad), lambda i: (0, 0)),         # b7 (f32)
                pl.BlockSpec((h_pad, out_pad), lambda i: (0, 0)),   # wc|wb combined (bf16)
                pl.BlockSpec((1, out_pad), lambda i: (0, 0)),       # bc|bb combined (f32)
            ],
            out_specs=pl.BlockSpec((tile_r, out_pad), lambda i: (i, 0)),
        ),
        compiler_params=pltpu.CompilerParams(
            dimension_semantics=("parallel",)),
    )(x_pad, roi_ext, kp["w6"], kp["b6"], kp["w7"], kp["b7"], kp["wcb"], kp["bcb"])


# ======================= RoI Align (plain-JAX glue) ==========================
def roi_align(feat, rois, roi_batch_idx, spatial_scale, output_size, sampling_ratio):
    # feat: [N, C, H, W] (NCHW), rois: [R, 4] image coords (x1,y1,x2,y2), aligned=False.
    # The shared feature map is gathered with the per-roi batch index (no
    # [R, C, H, W] replication).
    _, c, h, w = feat.shape
    os_, sr = output_size, sampling_ratio
    feat_cl = jnp.transpose(feat, (0, 2, 3, 1))                  # [N, H, W, C]

    x1 = rois[:, 0] * spatial_scale
    y1 = rois[:, 1] * spatial_scale
    x2 = rois[:, 2] * spatial_scale
    y2 = rois[:, 3] * spatial_scale
    roi_w = jnp.maximum(x2 - x1, 1.0)
    roi_h = jnp.maximum(y2 - y1, 1.0)
    bin_w = roi_w / os_
    bin_h = roi_h / os_

    frac = (jnp.arange(sr, dtype=jnp.float32) + 0.5) / sr        # [SR]
    p = jnp.arange(os_, dtype=jnp.float32)                       # [OS]
    ys = y1[:, None, None] + (p[None, :, None] + frac[None, None, :]) * bin_h[:, None, None]
    xs = x1[:, None, None] + (p[None, :, None] + frac[None, None, :]) * bin_w[:, None, None]

    def sample_one(b, ys_r, xs_r):
        y = ys_r.reshape(-1)                                     # [OS*SR]
        x = xs_r.reshape(-1)
        yy = y[:, None] * jnp.ones_like(x)[None, :]              # [S, S]
        xx = jnp.ones_like(y)[:, None] * x[None, :]
        valid = (yy >= -1.0) & (yy <= h) & (xx >= -1.0) & (xx <= w)
        yc = jnp.clip(yy, 0.0, h - 1.0)
        xc = jnp.clip(xx, 0.0, w - 1.0)
        y0 = jnp.floor(yc).astype(jnp.int32)
        x0 = jnp.floor(xc).astype(jnp.int32)
        y1i = jnp.minimum(y0 + 1, h - 1)
        x1i = jnp.minimum(x0 + 1, w - 1)
        ly = yc - y0.astype(jnp.float32)
        lx = xc - x0.astype(jnp.float32)
        hy = 1.0 - ly
        hx = 1.0 - lx
        v00 = feat_cl[b, y0, x0]                                 # [S, S, C]
        v01 = feat_cl[b, y0, x1i]
        v10 = feat_cl[b, y1i, x0]
        v11 = feat_cl[b, y1i, x1i]
        val = (hy[..., None] * hx[..., None] * v00 + hy[..., None] * lx[..., None] * v01
               + ly[..., None] * hx[..., None] * v10 + ly[..., None] * lx[..., None] * v11)
        val = jnp.where(valid[..., None], val, 0.0)
        val = val.reshape(os_, sr, os_, sr, c).mean(axis=(1, 3))  # [OS, OS, C]
        return jnp.transpose(val, (2, 0, 1))                      # [C, OS, OS]

    return jax.vmap(sample_one, in_axes=(0, 0, 0))(roi_batch_idx, ys, xs)   # [R,C,OS,OS]


# ================== device-side forward (single jit) =========================
@jax.jit
def _device_forward(feat, rois, batch_idx, imghw, spatial_scale, kp):
    k = NUM_CLASSES

    # box_roi_pool (MultiScaleRoIAlign, single level) — XLA glue.
    pooled = roi_align(feat, rois, batch_idx, spatial_scale, POOL_SIZE, SAMPLING_RATIO)
    pooled_flat = pooled.reshape(pooled.shape[0], -1)             # [R, C*7*7]

    r = pooled_flat.shape[0]
    in_feats = pooled_flat.shape[1]
    in_pad = kp["w6"].shape[0]

    # RoI tiling: single padded tile for small R (rows rounded to 16 for bf16),
    # TILE_R=512 grid for large R (keeps grid-step overhead amortized and >=4
    # steps for R>=2048 so both v7x TensorCores stay busy).
    if r <= LARGE_R_TILE:
        tile_r = _round_up(max(r, 16), 16)
    else:
        tile_r = LARGE_R_TILE
    r_pad = _round_up(r, tile_r)

    x_pad = jnp.zeros((r_pad, in_pad), jnp.bfloat16)
    x_pad = x_pad.at[:r, :in_feats].set(pooled_flat.astype(jnp.bfloat16))

    # rois + per-roi image (h, w) packed into one small [R_pad, 8] input.
    roi_ext = jnp.zeros((r_pad, 8), jnp.float32)
    roi_ext = roi_ext.at[:r, 0:4].set(rois).at[:r, 4:6].set(imghw)

    # Fused box_head + box_predictor + decode + clip + softmax (single Pallas call).
    out = run_fused_head(x_pad, roi_ext, kp, tile_r)

    pred_scores = out[:r, 0:k]                                        # [R, K]
    pred_boxes = jnp.stack(
        [out[:r, k:2 * k], out[:r, 2 * k:3 * k],
         out[:r, 3 * k:4 * k], out[:r, 4 * k:5 * k]], axis=-1)        # [R, K, 4]
    return pred_boxes, pred_scores


# ================== postprocess_detections (host numpy glue) =================
def _nms_np(boxes, scores, iou_threshold):
    if boxes.shape[0] == 0:
        return np.zeros((0,), dtype=np.int64)
    x1, y1, x2, y2 = boxes[:, 0], boxes[:, 1], boxes[:, 2], boxes[:, 3]
    areas = (x2 - x1) * (y2 - y1)
    order = np.argsort(-scores, kind="stable")
    keep = []
    while order.size > 0:
        i = order[0]
        keep.append(i)
        rest = order[1:]
        xx1 = np.maximum(x1[i], x1[rest])
        yy1 = np.maximum(y1[i], y1[rest])
        xx2 = np.minimum(x2[i], x2[rest])
        yy2 = np.minimum(y2[i], y2[rest])
        inter = np.maximum(0.0, xx2 - xx1) * np.maximum(0.0, yy2 - yy1)
        iou = inter / (areas[i] + areas[rest] - inter + 1e-12)
        order = rest[iou <= iou_threshold]
    return np.asarray(keep, dtype=np.int64)


def _batched_nms_np(boxes, scores, labels, iou_threshold):
    if boxes.shape[0] == 0:
        return np.zeros((0,), dtype=np.int64)
    max_coord = boxes.max()
    offsets = labels.astype(boxes.dtype) * (max_coord + 1.0)
    return _nms_np(boxes + offsets[:, None], scores, iou_threshold)


def postprocess_detections_np(pred_boxes, pred_scores, boxes_per_image):
    pred_boxes = np.asarray(pred_boxes)      # [R, K, 4], already clipped to image
    pred_scores = np.asarray(pred_scores)    # [R, K]
    splits = np.cumsum(boxes_per_image)[:-1]
    all_boxes, all_scores, all_labels = [], [], []
    for boxes, scores in zip(np.split(pred_boxes, splits, axis=0),
                             np.split(pred_scores, splits, axis=0)):
        k = scores.shape[1]
        labels = np.tile(np.arange(k)[None, :], (scores.shape[0], 1))
        boxes, scores, labels = boxes[:, 1:], scores[:, 1:], labels[:, 1:]   # drop bg
        boxes = boxes.reshape(-1, 4)
        scores = scores.reshape(-1)
        labels = labels.reshape(-1)
        inds = np.where(scores > SCORE_THRESH)[0]
        boxes, scores, labels = boxes[inds], scores[inds], labels[inds]
        ws = boxes[:, 2] - boxes[:, 0]
        hs = boxes[:, 3] - boxes[:, 1]
        keep = np.where((ws >= 0.01) & (hs >= 0.01))[0]      # remove_small_boxes
        boxes, scores, labels = boxes[keep], scores[keep], labels[keep]
        keep = _batched_nms_np(boxes, scores, labels, NMS_THRESH)[:DETECTIONS_PER_IMG]
        all_boxes.append(boxes[keep])
        all_scores.append(scores[keep])
        all_labels.append(labels[keep].astype(np.int64))
    return all_boxes, all_scores, all_labels


# ========================= parameters (deterministic) ========================
def init_params(key):
    ks = jax.random.split(key, 8)
    in_feats = 4 * POOL_SIZE * POOL_SIZE

    def lin_w(k, fi, fo):
        bound = 1.0 / math.sqrt(fi)
        return jax.random.uniform(k, (fi, fo), jnp.float32, -bound, bound)

    def lin_b(k, fi, fo):
        bound = 1.0 / math.sqrt(fi)
        return jax.random.uniform(k, (1, fo), jnp.float32, -bound, bound)

    return {
        "w6": lin_w(ks[0], in_feats, REPRESENTATION_SIZE),
        "b6": lin_b(ks[1], in_feats, REPRESENTATION_SIZE),
        "w7": lin_w(ks[2], REPRESENTATION_SIZE, REPRESENTATION_SIZE),
        "b7": lin_b(ks[3], REPRESENTATION_SIZE, REPRESENTATION_SIZE),
        "wc": lin_w(ks[4], REPRESENTATION_SIZE, NUM_CLASSES),
        "bc": lin_b(ks[5], REPRESENTATION_SIZE, NUM_CLASSES),
        "wb": lin_w(ks[6], REPRESENTATION_SIZE, NUM_CLASSES * 4),
        "bb": lin_b(ks[7], REPRESENTATION_SIZE, NUM_CLASSES * 4),
    }


def pack_params(params):
    """Zero-pad to 128-aligned MXU shapes, fuse cls/bbox heads into one weight and
    cast weights to bf16 (biases stay f32, added to the f32 accumulator).

    bbox columns are reordered class-major (k*4+c) -> coordinate-major (c*K+k) so
    the kernel decode slices contiguous K-wide lane blocks.  Zero padding keeps
    numerics identical (ReLU(0)=0, zero weight rows/cols contribute nothing).
    Only jnp arrays in the returned dict (it is a jit pytree argument).
    """
    k = NUM_CLASSES
    in_feats, hid = params["w6"].shape
    in_pad = _round_up(in_feats, 128)
    h_pad = _round_up(hid, 128)
    out_pad = _round_up(5 * k, 128)

    w6 = jnp.zeros((in_pad, h_pad), jnp.float32).at[:in_feats, :hid].set(params["w6"])
    b6 = jnp.zeros((1, h_pad), jnp.float32).at[:, :hid].set(params["b6"])
    w7 = jnp.zeros((h_pad, h_pad), jnp.float32).at[:hid, :hid].set(params["w7"])
    b7 = jnp.zeros((1, h_pad), jnp.float32).at[:, :hid].set(params["b7"])

    wb_cm = params["wb"].reshape(hid, k, 4).transpose(0, 2, 1).reshape(hid, 4 * k)
    bb_cm = params["bb"].reshape(1, k, 4).transpose(0, 2, 1).reshape(1, 4 * k)

    wcb = jnp.zeros((h_pad, out_pad), jnp.float32)
    wcb = wcb.at[:hid, 0:k].set(params["wc"]).at[:hid, k:5 * k].set(wb_cm)
    bcb = jnp.zeros((1, out_pad), jnp.float32)
    bcb = bcb.at[:, 0:k].set(params["bc"]).at[:, k:5 * k].set(bb_cm)

    return {"w6": w6.astype(jnp.bfloat16), "b6": b6,
            "w7": w7.astype(jnp.bfloat16), "b7": b7,
            "wcb": wcb.astype(jnp.bfloat16), "bcb": bcb}


# ============================ RoIHeads.forward (eval) ========================
def roi_heads_forward_inference(features, proposals_list, image_shapes, kparams):
    feat = features["0"]                              # [N, C, Hf, Wf] (NCHW)
    # Single-level MultiScaleRoIAlign scale.
    # TODO(synk): assumes all images in the batch share the padded size; mixed-size
    # batches need per-image scales like torchvision's MultiScaleRoIAlign.
    spatial_scale = float(feat.shape[2]) / float(image_shapes[0][0])

    rois = jnp.concatenate(proposals_list, axis=0)    # [R, 4]
    batch_idx = jnp.concatenate(
        [jnp.full((int(p.shape[0]),), i, dtype=jnp.int32)
         for i, p in enumerate(proposals_list)])

    # per-roi image (h, w) — static per image, built on host.
    imghw = jnp.asarray(np.concatenate(
        [np.tile(np.array([[float(h), float(w)]], np.float32), (int(p.shape[0]), 1))
         for p, (h, w) in zip(proposals_list, image_shapes)], axis=0))

    # Single jitted device path: roi_align + pad/pack + fused Pallas head + slicing.
    pred_boxes, pred_scores = _device_forward(
        feat, rois, batch_idx, imghw, jnp.float32(spatial_scale), kparams)

    # postprocess_detections (host-side, data-dependent shapes).
    boxes_per_image = [int(p.shape[0]) for p in proposals_list]
    boxes, scores, labels = postprocess_detections_np(pred_boxes, pred_scores,
                                                      boxes_per_image)
    result = []
    for i in range(len(boxes)):
        result.append({
            "boxes": jnp.asarray(boxes[i], jnp.float32),
            "labels": jnp.asarray(labels[i], jnp.int32),  # torch int64; jax x64 off
            "scores": jnp.asarray(scores[i], jnp.float32),
        })
    losses = {}
    return result, losses


# ================================== main =====================================
if __name__ == "__main__":
    key = jax.random.PRNGKey(0)
    k_feat, k_prop, k_par = jax.random.split(key, 3)

    N, C, HF, WF = 2, 4, 16, 16
    IMG_H, IMG_W = 32, 32
    R_PER_IMG = 8

    features = {"0": jax.random.normal(k_feat, (N, C, HF, WF), jnp.float32)}

    def make_props(k):
        ka, kb = jax.random.split(k)
        xy = jax.random.uniform(ka, (R_PER_IMG, 2), jnp.float32, 0.0, 18.0)
        wh = jax.random.uniform(kb, (R_PER_IMG, 2), jnp.float32, 4.0, 12.0)
        return jnp.concatenate([xy, xy + wh], axis=1)

    kp1, kp2 = jax.random.split(k_prop)
    proposals = [make_props(kp1), make_props(kp2)]
    image_shapes = [(IMG_H, IMG_W), (IMG_H, IMG_W)]

    params = init_params(k_par)
    kparams = pack_params(params)

    result, losses = roi_heads_forward_inference(features, proposals, image_shapes,
                                                 kparams)
    jax.block_until_ready([d["boxes"] for d in result])

    assert isinstance(losses, dict) and len(losses) == 0
    assert len(result) == 2
    for det in result:
        assert det["boxes"].shape[0] == det["scores"].shape[0] == det["labels"].shape[0]
        assert det["boxes"].shape[0] <= DETECTIONS_PER_IMG

    print("KERNEL_OK")
</pallas_src>

<mosaic_0001>
module attributes {stable_mosaic.version = 11 : i64} {
  func.func @_fused_head_decode_kernel(%arg0: i32, %arg1: memref<16x256xbf16, #tpu.memory_space<vmem>>, %arg2: memref<16x8xf32, #tpu.memory_space<vmem>>, %arg3: memref<256x128xbf16, #tpu.memory_space<vmem>>, %arg4: memref<1x128xf32, #tpu.memory_space<vmem>>, %arg5: memref<128x128xbf16, #tpu.memory_space<vmem>>, %arg6: memref<1x128xf32, #tpu.memory_space<vmem>>, %arg7: memref<128x128xbf16, #tpu.memory_space<vmem>>, %arg8: memref<1x128xf32, #tpu.memory_space<vmem>>, %arg9: memref<16x128xf32, #tpu.memory_space<vmem>>) attributes {dimension_semantics = [#tpu.dimension_semantics<parallel>], iteration_bounds = array<i64: 1>, scalar_prefetch = 0 : i64, scratch_operands = 0 : i64, tpu.core_type = #tpu.core_type<tc>, window_params = [{transform_indices = @transform_0, window_bounds = array<i64: 16, 256>}, {transform_indices = @transform_1, window_bounds = array<i64: 16, 8>}, {pipeline_mode = #tpu.pipeline_mode<synchronous>, transform_indices = @transform_2, window_bounds = array<i64: 256, 128>}, {pipeline_mode = #tpu.pipeline_mode<synchronous>, transform_indices = @transform_3, window_bounds = array<i64: 1, 128>}, {pipeline_mode = #tpu.pipeline_mode<synchronous>, transform_indices = @transform_4, window_bounds = array<i64: 128, 128>}, {pipeline_mode = #tpu.pipeline_mode<synchronous>, transform_indices = @transform_5, window_bounds = array<i64: 1, 128>}, {pipeline_mode = #tpu.pipeline_mode<synchronous>, transform_indices = @transform_6, window_bounds = array<i64: 128, 128>}, {pipeline_mode = #tpu.pipeline_mode<synchronous>, transform_indices = @transform_7, window_bounds = array<i64: 1, 128>}, {transform_indices = @transform_8, window_bounds = array<i64: 16, 128>}]} {
    %c0 = arith.constant 0 : index
    %c0_0 = arith.constant 0 : index
    %0 = vector.load %arg1[%c0, %c0_0] : memref<16x256xbf16, #tpu.memory_space<vmem>>, vector<16x256xbf16>
    %c0_1 = arith.constant 0 : index
    %c0_2 = arith.constant 0 : index
    %1 = vector.load %arg3[%c0_1, %c0_2] : memref<256x128xbf16, #tpu.memory_space<vmem>>, vector<256x128xbf16>
    %cst = arith.constant dense<0.000000e+00> : vector<16x128xf32>
    %2 = tpu.matmul %0, %1, %cst {dimension_numbers = #tpu.dot_dimension_numbers<[1], [0], [0], [1], [0, 0, 1, 1], [], []>} : vector<16x256xbf16>, vector<256x128xbf16>, vector<16x128xf32> -> vector<16x128xf32>
    %c0_3 = arith.constant 0 : index
    %c0_4 = arith.constant 0 : index
    %3 = vector.load %arg4[%c0_3, %c0_4] : memref<1x128xf32, #tpu.memory_space<vmem>>, vector<1x128xf32>
    %4 = vector.broadcast %3 : vector<1x128xf32> to vector<16x128xf32>
    %5 = arith.addf %2, %4 : vector<16x128xf32>
    %cst_5 = arith.constant 0.000000e+00 : f32
    %6 = vector.broadcast %cst_5 : f32 to vector<16x128xf32>
    %7 = arith.maximumf %5, %6 : vector<16x128xf32>
    %8 = arith.truncf %7 : vector<16x128xf32> to vector<16x128xbf16>
    %c0_6 = arith.constant 0 : index
    %c0_7 = arith.constant 0 : index
    %9 = vector.load %arg5[%c0_6, %c0_7] : memref<128x128xbf16, #tpu.memory_space<vmem>>, vector<128x128xbf16>
    %cst_8 = arith.constant dense<0.000000e+00> : vector<16x128xf32>
    %10 = tpu.matmul %8, %9, %cst_8 {dimension_numbers = #tpu.dot_dimension_numbers<[1], [0], [0], [1], [0, 0, 1, 1], [], []>} : vector<16x128xbf16>, vector<128x128xbf16>, vector<16x128xf32> -> vector<16x128xf32>
    %c0_9 = arith.constant 0 : index
    %c0_10 = arith.constant 0 : index
    %11 = vector.load %arg6[%c0_9, %c0_10] : memref<1x128xf32, #tpu.memory_space<vmem>>, vector<1x128xf32>
    %12 = vector.broadcast %11 : vector<1x128xf32> to vector<16x128xf32>
    %13 = arith.addf %10, %12 : vector<16x128xf32>
    %cst_11 = arith.constant 0.000000e+00 : f32
    %14 = vector.broadcast %cst_11 : f32 to vector<16x128xf32>
    %15 = arith.maximumf %13, %14 : vector<16x128xf32>
    %16 = arith.truncf %15 : vector<16x128xf32> to vector<16x128xbf16>
    %c0_12 = arith.constant 0 : index
    %c0_13 = arith.constant 0 : index
    %17 = vector.load %arg7[%c0_12, %c0_13] : memref<128x128xbf16, #tpu.memory_space<vmem>>, vector<128x128xbf16>
    %cst_14 = arith.constant dense<0.000000e+00> : vector<16x128xf32>
    %18 = tpu.matmul %16, %17, %cst_14 {dimension_numbers = #tpu.dot_dimension_numbers<[1], [0], [0], [1], [0, 0, 1, 1], [], []>} : vector<16x128xbf16>, vector<128x128xbf16>, vector<16x128xf32> -> vector<16x128xf32>
    %c0_15 = arith.constant 0 : index
    %c0_16 = arith.constant 0 : index
    %19 = vector.load %arg8[%c0_15, %c0_16] : memref<1x128xf32, #tpu.memory_space<vmem>>, vector<1x128xf32>
    %20 = vector.broadcast %19 : vector<1x128xf32> to vector<16x128xf32>
    %21 = arith.addf %18, %20 : vector<16x128xf32>
    %22 = vector.extract_strided_slice %21 {offsets = [0, 0], sizes = [16, 5], strides = [1, 1]} : vector<16x128xf32> to vector<16x5xf32>
    %cst_17 = arith.constant dense<0xFF800000> : vector<16xf32>
    %23 = vector.multi_reduction <maximumf>, %22, %cst_17 [1] : vector<16x5xf32> to vector<16xf32>
    %24 = vector.shape_cast %23 : vector<16xf32> to vector<16x1xf32>
    %25 = vector.broadcast %24 : vector<16x1xf32> to vector<16x5xf32>
    %26 = arith.subf %22, %25 : vector<16x5xf32>
    %27 = math.exp %26 : vector<16x5xf32>
    %cst_18 = arith.constant dense<0.000000e+00> : vector<16xf32>
    %28 = vector.multi_reduction <add>, %27, %cst_18 [1] : vector<16x5xf32> to vector<16xf32>
    %29 = vector.shape_cast %28 : vector<16xf32> to vector<16x1xf32>
    %30 = tpu.reciprocal %29 {approx = true} : vector<16x1xf32> -> vector<16x1xf32>
    %31 = vector.broadcast %30 : vector<16x1xf32> to vector<16x5xf32>
    %32 = arith.mulf %27, %31 : vector<16x5xf32>
    %c0_19 = arith.constant 0 : index
    %c0_20 = arith.constant 0 : index
    %33 = vector.load %arg2[%c0_19, %c0_20] : memref<16x8xf32, #tpu.memory_space<vmem>>, vector<16x8xf32>
    %34 = vector.extract_strided_slice %33 {offsets = [0, 0], sizes = [16, 1], strides = [1, 1]} : vector<16x8xf32> to vector<16x1xf32>
    %35 = vector.extract_strided_slice %33 {offsets = [0, 1], sizes = [16, 1], strides = [1, 1]} : vector<16x8xf32> to vector<16x1xf32>
    %36 = vector.extract_strided_slice %33 {offsets = [0, 2], sizes = [16, 1], strides = [1, 1]} : vector<16x8xf32> to vector<16x1xf32>
    %37 = vector.extract_strided_slice %33 {offsets = [0, 3], sizes = [16, 1], strides = [1, 1]} : vector<16x8xf32> to vector<16x1xf32>
    %38 = vector.extract_strided_slice %33 {offsets = [0, 4], sizes = [16, 1], strides = [1, 1]} : vector<16x8xf32> to vector<16x1xf32>
    %39 = vector.extract_strided_slice %33 {offsets = [0, 5], sizes = [16, 1], strides = [1, 1]} : vector<16x8xf32> to vector<16x1xf32>
    %40 = arith.subf %36, %34 : vector<16x1xf32>
    %41 = arith.subf %37, %35 : vector<16x1xf32>
    %cst_21 = arith.constant 5.000000e-01 : f32
    %42 = vector.broadcast %cst_21 : f32 to vector<16x1xf32>
    %43 = arith.mulf %42, %40 : vector<16x1xf32>
    %44 = arith.addf %34, %43 : vector<16x1xf32>
    %cst_22 = arith.constant 5.000000e-01 : f32
    %45 = vector.broadcast %cst_22 : f32 to vector<16x1xf32>
    %46 = arith.mulf %45, %41 : vector<16x1xf32>
    %47 = arith.addf %35, %46 : vector<16x1xf32>
    %48 = vector.extract_strided_slice %21 {offsets = [0, 5], sizes = [16, 5], strides = [1, 1]} : vector<16x128xf32> to vector<16x5xf32>
    %cst_23 = arith.constant 1.000000e+01 : f32
    %49 = vector.broadcast %cst_23 : f32 to vector<16x5xf32>
    %50 = arith.divf %48, %49 : vector<16x5xf32>
    %51 = vector.extract_strided_slice %21 {offsets = [0, 10], sizes = [16, 5], strides = [1, 1]} : vector<16x128xf32> to vector<16x5xf32>
    %cst_24 = arith.constant 1.000000e+01 : f32
    %52 = vector.broadcast %cst_24 : f32 to vector<16x5xf32>
    %53 = arith.divf %51, %52 : vector<16x5xf32>
    %54 = vector.extract_strided_slice %21 {offsets = [0, 15], sizes = [16, 5], strides = [1, 1]} : vector<16x128xf32> to vector<16x5xf32>
    %cst_25 = arith.constant 5.000000e+00 : f32
    %55 = vector.broadcast %cst_25 : f32 to vector<16x5xf32>
    %56 = arith.divf %54, %55 : vector<16x5xf32>
    %cst_26 = arith.constant 4.13516665 : f32
    %57 = vector.broadcast %cst_26 : f32 to vector<16x5xf32>
    %58 = arith.minimumf %56, %57 : vector<16x5xf32>
    %59 = vector.extract_strided_slice %21 {offsets = [0, 20], sizes = [16, 5], strides = [1, 1]} : vector<16x128xf32> to vector<16x5xf32>
    %cst_27 = arith.constant 5.000000e+00 : f32
    %60 = vector.broadcast %cst_27 : f32 to vector<16x5xf32>
    %61 = arith.divf %59, %60 : vector<16x5xf32>
    %cst_28 = arith.constant 4.13516665 : f32
    %62 = vector.broadcast %cst_28 : f32 to vector<16x5xf32>
    %63 = arith.minimumf %61, %62 : vector<16x5xf32>
    %64 = vector.broadcast %40 : vector<16x1xf32> to vector<16x5xf32>
    %65 = arith.mulf %50, %64 : vector<16x5xf32>
    %66 = vector.broadcast %44 : vector<16x1xf32> to vector<16x5xf32>
    %67 = arith.addf %65, %66 : vector<16x5xf32>
    %68 = vector.broadcast %41 : vector<16x1xf32> to vector<16x5xf32>
    %69 = arith.mulf %53, %68 : vector<16x5xf32>
    %70 = vector.broadcast %47 : vector<16x1xf32> to vector<16x5xf32>
    %71 = arith.addf %69, %70 : vector<16x5xf32>
    %72 = math.exp %58 : vector<16x5xf32>
    %73 = vector.broadcast %40 : vector<16x1xf32> to vector<16x5xf32>
    %74 = arith.mulf %72, %73 : vector<16x5xf32>
    %75 = math.exp %63 : vector<16x5xf32>
    %76 = vector.broadcast %41 : vector<16x1xf32> to vector<16x5xf32>
    %77 = arith.mulf %75, %76 : vector<16x5xf32>
    %cst_29 = arith.constant 5.000000e-01 : f32
    %78 = vector.broadcast %cst_29 : f32 to vector<16x5xf32>
    %79 = arith.mulf %78, %74 : vector<16x5xf32>
    %80 = arith.subf %67, %79 : vector<16x5xf32>
    %cst_30 = arith.constant 0.000000e+00 : f32
    %81 = vector.broadcast %cst_30 : f32 to vector<16x5xf32>
    %82 = arith.maximumf %81, %80 : vector<16x5xf32>
    %83 = vector.broadcast %39 : vector<16x1xf32> to vector<16x5xf32>
    %84 = arith.minimumf %83, %82 : vector<16x5xf32>
    %cst_31 = arith.constant 5.000000e-01 : f32
    %85 = vector.broadcast %cst_31 : f32 to vector<16x5xf32>
    %86 = arith.mulf %85, %77 : vector<16x5xf32>
    %87 = arith.subf %71, %86 : vector<16x5xf32>
    %cst_32 = arith.constant 0.000000e+00 : f32
    %88 = vector.broadcast %cst_32 : f32 to vector<16x5xf32>
    %89 = arith.maximumf %88, %87 : vector<16x5xf32>
    %90 = vector.broadcast %38 : vector<16x1xf32> to vector<16x5xf32>
    %91 = arith.minimumf %90, %89 : vector<16x5xf32>
    %cst_33 = arith.constant 5.000000e-01 : f32
    %92 = vector.broadcast %cst_33 : f32 to vector<16x5xf32>
    %93 = arith.mulf %92, %74 : vector<16x5xf32>
    %94 = arith.addf %67, %93 : vector<16x5xf32>
    %cst_34 = arith.constant 0.000000e+00 : f32
    %95 = vector.broadcast %cst_34 : f32 to vector<16x5xf32>
    %96 = arith.maximumf %95, %94 : vector<16x5xf32>
    %97 = vector.broadcast %39 : vector<16x1xf32> to vector<16x5xf32>
    %98 = arith.minimumf %97, %96 : vector<16x5xf32>
    %cst_35 = arith.constant 5.000000e-01 : f32
    %99 = vector.broadcast %cst_35 : f32 to vector<16x5xf32>
    %100 = arith.mulf %99, %77 : vector<16x5xf32>
    %101 = arith.addf %71, %100 : vector<16x5xf32>
    %cst_36 = arith.constant 0.000000e+00 : f32
    %102 = vector.broadcast %cst_36 : f32 to vector<16x5xf32>
    %103 = arith.maximumf %102, %101 : vector<16x5xf32>
    %104 = vector.broadcast %38 : vector<16x1xf32> to vector<16x5xf32>
    %105 = arith.minimumf %104, %103 : vector<16x5xf32>
    %cst_37 = arith.constant 0.000000e+00 : f32
    %106 = vector.broadcast %cst_37 : f32 to vector<16x128xf32>
    %c0_38 = arith.constant 0 : index
    %c0_39 = arith.constant 0 : index
    %107 = vector.load %arg9[%c0_38, %c0_39] : memref<16x128xf32, #tpu.memory_space<vmem>>, vector<16x128xf32>
    tpu.vector_store %arg9[%c0_38, %c0_39], %106 {strides = array<i32>} : memref<16x128xf32, #tpu.memory_space<vmem>>, vector<16x128xf32>,
    %c0_40 = arith.constant 0 : index
    %c0_41 = arith.constant 0 : index
    %108 = vector.load %arg9[%c0_40, %c0_41] : memref<16x128xf32, #tpu.memory_space<vmem>>, vector<16x5xf32>
    tpu.vector_store %arg9[%c0_40, %c0_41], %32 {strides = array<i32>} : memref<16x128xf32, #tpu.memory_space<vmem>>, vector<16x5xf32>,
    %c0_42 = arith.constant 0 : index
    %c5 = arith.constant 5 : index
    %109 = vector.load %arg9[%c0_42, %c5] : memref<16x128xf32, #tpu.memory_space<vmem>>, vector<16x5xf32>
    tpu.vector_store %arg9[%c0_42, %c5], %84 {strides = array<i32>} : memref<16x128xf32, #tpu.memory_space<vmem>>, vector<16x5xf32>,
    %c0_43 = arith.constant 0 : index
    %c10 = arith.constant 10 : index
    %110 = vector.load %arg9[%c0_43, %c10] : memref<16x128xf32, #tpu.memory_space<vmem>>, vector<16x5xf32>
    tpu.vector_store %arg9[%c0_43, %c10], %91 {strides = array<i32>} : memref<16x128xf32, #tpu.memory_space<vmem>>, vector<16x5xf32>,
    %c0_44 = arith.constant 0 : index
    %c15 = arith.constant 15 : index
    %111 = vector.load %arg9[%c0_44, %c15] : memref<16x128xf32, #tpu.memory_space<vmem>>, vector<16x5xf32>
    tpu.vector_store %arg9[%c0_44, %c15], %98 {strides = array<i32>} : memref<16x128xf32, #tpu.memory_space<vmem>>, vector<16x5xf32>,
    %c0_45 = arith.constant 0 : index
    %c20 = arith.constant 20 : index
    %112 = vector.load %arg9[%c0_45, %c20] : memref<16x128xf32, #tpu.memory_space<vmem>>, vector<16x5xf32>
    tpu.vector_store %arg9[%c0_45, %c20], %105 {strides = array<i32>} : memref<16x128xf32, #tpu.memory_space<vmem>>, vector<16x5xf32>,
    return
  }
  func.func @transform_0(%arg0: i32) -> (i32, i32) {
    %c0_i32 = arith.constant 0 : i32
    %c0_i32_0 = arith.constant 0 : i32
    return %arg0, %c0_i32 : i32, i32
  }
  func.func @transform_1(%arg0: i32) -> (i32, i32) {
    %c0_i32 = arith.constant 0 : i32
    %c0_i32_0 = arith.constant 0 : i32
    return %arg0, %c0_i32 : i32, i32
  }
  func.func @transform_2(%arg0: i32) -> (i32, i32) {
    %c0_i32 = arith.constant 0 : i32
    %c0_i32_0 = arith.constant 0 : i32
    %c0_i32_1 = arith.constant 0 : i32
    return %c0_i32, %c0_i32_0 : i32, i32
  }
  func.func @transform_3(%arg0: i32) -> (i32, i32) {
    %c0_i32 = arith.constant 0 : i32
    %c0_i32_0 = arith.constant 0 : i32
    %c0_i32_1 = arith.constant 0 : i32
    return %c0_i32, %c0_i32_0 : i32, i32
  }
  func.func @transform_4(%arg0: i32) -> (i32, i32) {
    %c0_i32 = arith.constant 0 : i32
    %c0_i32_0 = arith.constant 0 : i32
    %c0_i32_1 = arith.constant 0 : i32
    return %c0_i32, %c0_i32_0 : i32, i32
  }
  func.func @transform_5(%arg0: i32) -> (i32, i32) {
    %c0_i32 = arith.constant 0 : i32
    %c0_i32_0 = arith.constant 0 : i32
    %c0_i32_1 = arith.constant 0 : i32
    return %c0_i32, %c0_i32_0 : i32, i32
  }
  func.func @transform_6(%arg0: i32) -> (i32, i32) {
    %c0_i32 = arith.constant 0 : i32
    %c0_i32_0 = arith.constant 0 : i32
    %c0_i32_1 = arith.constant 0 : i32
    return %c0_i32, %c0_i32_0 : i32, i32
  }
  func.func @transform_7(%arg0: i32) -> (i32, i32) {
    %c0_i32 = arith.constant 0 : i32
    %c0_i32_0 = arith.constant 0 : i32
    %c0_i32_1 = arith.constant 0 : i32
    return %c0_i32, %c0_i32_0 : i32, i32
  }
  func.func @transform_8(%arg0: i32) -> (i32, i32) {
    %c0_i32 = arith.constant 0 : i32
    %c0_i32_0 = arith.constant 0 : i32
    return %arg0, %c0_i32 : i32, i32
  }
}

</mosaic_0001>

<llo_original>
// kernel: _device_forward.1
$region0: #{_device_forward.1}
  #allocation0 [shape = 'u32[]', space=smem, size = 0x4, offset = 0x4, fixed_abs, tag = 'smem constant byte address 0x4 - core index']
  #allocation1 [shape = 'u32[144,128]{1,0:T(1,128)}', space=vmem, size = 0x12000, scoped, tag = 'internal scratch']
  %s0 = inlined_call_operand.vmem [shape: bf16[16,256], index: 0, kind: input, shape index: {}]
  %s1 = inlined_call_operand.vmem [shape: f32[16,8], index: 1, kind: input, shape index: {}]
  %s2 = inlined_call_operand.vmem [shape: bf16[256,128], index: 2, kind: input, shape index: {}]
  %s3 = inlined_call_operand.vmem [shape: f32[1,128], index: 3, kind: input, shape index: {}]
  %s4 = inlined_call_operand.vmem [shape: bf16[128,128], index: 4, kind: input, shape index: {}]
  %s5 = inlined_call_operand.vmem [shape: f32[1,128], index: 5, kind: input, shape index: {}]
  %s6 = inlined_call_operand.vmem [shape: bf16[128,128], index: 6, kind: input, shape index: {}]
  %s7 = inlined_call_operand.vmem [shape: f32[1,128], index: 7, kind: input, shape index: {}]
  %s8 = inlined_call_operand.vmem [shape: f32[16,128], index: 8, kind: output, shape index: {}]
  %s9 = sld [smem:[#allocation0]]
  $region42: #{_device_forward.1} parent=0
    _
  %s11 = ssub.s32 1, %s9
  %s12 = scalar_select 0, %s11, %s9
  // Predicated region
  $region2: #{_device_forward.1} parent=0 // pred_check
    _
  $region3: #{_device_forward.1} parent=0 // pred_check_branch
    %14 = sbr.rel (0) target = $region5
  $region4: #{_device_forward.1} parent=0 // pred_region
    _
  $region5: #{_device_forward.1} parent=0 // pred_fallthru
    _
  // Predicated region
  $region6: #{_device_forward.1} parent=0 // pred_check
    _
  $region7: #{_device_forward.1} parent=0 // pred_check_branch
    %16 = sbr.rel (0) target = $region9
  $region8: #{_device_forward.1} parent=0 // pred_region
    _
  $region9: #{_device_forward.1} parent=0 // pred_fallthru
    _
  // Predicated region
  $region10: #{_device_forward.1} parent=0 // pred_check
    _
  $region11: #{_device_forward.1} parent=0 // pred_check_branch
    %18 = sbr.rel (0) target = $region13
  $region12: #{_device_forward.1} parent=0 // pred_region
    _
  $region13: #{_device_forward.1} parent=0 // pred_fallthru
    _
  // Predicated region
  $region14: #{_device_forward.1} parent=0 // pred_check
    _
  $region15: #{_device_forward.1} parent=0 // pred_check_branch
    %20 = sbr.rel (0) target = $region17
  $region16: #{_device_forward.1} parent=0 // pred_region
    _
  $region17: #{_device_forward.1} parent=0 // pred_fallthru
    _
  // Predicated region
  $region18: #{_device_forward.1} parent=0 // pred_check
    _
  $region19: #{_device_forward.1} parent=0 // pred_check_branch
    %22 = sbr.rel (0) target = $region21
  $region20: #{_device_forward.1} parent=0 // pred_region
    _
  $region21: #{_device_forward.1} parent=0 // pred_fallthru
    _
  // Predicated region
  $region22: #{_device_forward.1} parent=0 // pred_check
    _
  $region23: #{_device_forward.1} parent=0 // pred_check_branch
    %24 = sbr.rel (0) target = $region25
  $region24: #{_device_forward.1} parent=0 // pred_region
    _
  $region25: #{_device_forward.1} parent=0 // pred_fallthru
    _
  // Predicated region
  $region26: #{_device_forward.1} parent=0 // pred_check
    _
  $region27: #{_device_forward.1} parent=0 // pred_check_branch
    %26 = sbr.rel (0) target = $region29
  $region28: #{_device_forward.1} parent=0 // pred_region
    _
  $region29: #{_device_forward.1} parent=0 // pred_fallthru
    _
  // Predicated region
  $region30: #{_device_forward.1} parent=0 // pred_check
    _
  $region31: #{_device_forward.1} parent=0 // pred_check_branch
    %28 = sbr.rel (0) target = $region33
  $region32: #{_device_forward.1} parent=0 // pred_region
    _
  $region33: #{_device_forward.1} parent=0 // pred_fallthru
    _
  %v30 = vld [vmem:[%s0] sm:$0xff]
  %v31 = vld [vmem:[%s0 + $0x8] sm:$0xff]
  %v32 = vld [vmem:[%s2] sm:$0xf]
  %v33 = vld [vmem:[%s2 + $0x4] sm:$0xf]
  %v34 = vld [vmem:[%s2 + $0x8] sm:$0xf]
  %v35 = vld [vmem:[%s2 + $0xc] sm:$0xf]
  %v36 = vld [vmem:[%s2 + $0x10] sm:$0xf]
  %v37 = vld [vmem:[%s2 + $0x14] sm:$0xf]
  %v38 = vld [vmem:[%s2 + $0x18] sm:$0xf]
  %v39 = vld [vmem:[%s2 + $0x1c] sm:$0xf]
  %v40 = vld [vmem:[%s2 + $0x20] sm:$0xf]
  %v41 = vld [vmem:[%s2 + $0x24] sm:$0xf]
  %v42 = vld [vmem:[%s2 + $0x28] sm:$0xf]
  %v43 = vld [vmem:[%s2 + $0x2c] sm:$0xf]
  %v44 = vld [vmem:[%s2 + $0x30] sm:$0xf]
  %v45 = vld [vmem:[%s2 + $0x34] sm:$0xf]
  %v46 = vld [vmem:[%s2 + $0x38] sm:$0xf]
  %v47 = vld [vmem:[%s2 + $0x3c] sm:$0xf]
  %v48 = vld [vmem:[%s2 + $0x40] sm:$0xf]
  %v49 = vld [vmem:[%s2 + $0x44] sm:$0xf]
  %v50 = vld [vmem:[%s2 + $0x48] sm:$0xf]
  %v51 = vld [vmem:[%s2 + $0x4c] sm:$0xf]
  %v52 = vld [vmem:[%s2 + $0x50] sm:$0xf]
  %v53 = vld [vmem:[%s2 + $0x54] sm:$0xf]
  %v54 = vld [vmem:[%s2 + $0x58] sm:$0xf]
  %v55 = vld [vmem:[%s2 + $0x5c] sm:$0xf]
  %v56 = vld [vmem:[%s2 + $0x60] sm:$0xf]
  %v57 = vld [vmem:[%s2 + $0x64] sm:$0xf]
  %v58 = vld [vmem:[%s2 + $0x68] sm:$0xf]
  %v59 = vld [vmem:[%s2 + $0x6c] sm:$0xf]
  %v60 = vld [vmem:[%s2 + $0x70] sm:$0xf]
  %v61 = vld [vmem:[%s2 + $0x74] sm:$0xf]
  %v62 = vld [vmem:[%s2 + $0x78] sm:$0xf]
  %v63 = vld [vmem:[%s2 + $0x7c] sm:$0xf]
  %v64 = vld [vmem:[%s3] sm:$0x1]
  %v66 = vlaneseq
  %v67 = vshrl.u32 %v66, 7
  %v68 = vsub.s32 0, %v67
  %v69 = vrot.slane %v64, %v68
  %v73 = vunpack.c.l.b16 %v30
  %v74 = vunpack.c.h.b16 %v30
  %v75 = vunpack.c.l.b16 %v31
  %v76 = vunpack.c.h.b16 %v31
  %v77 = vpack.c.b16 %v75, %v73
  %v78 = vpack.c.b16 %v76, %v74
  %v113 = vunpack.c.l.b16 %v32
  %v114 = vunpack.c.l.b16 %v33
  %v115 = vunpack.c.l.b16 %v34
  %v116 = vunpack.c.l.b16 %v35
  %v117 = vunpack.c.l.b16 %v36
  %v118 = vunpack.c.l.b16 %v37
  %v119 = vunpack.c.l.b16 %v38
  %v120 = vunpack.c.l.b16 %v39
  %v121 = vunpack.c.l.b16 %v40
  %v122 = vunpack.c.l.b16 %v41
  %v123 = vunpack.c.l.b16 %v42
  %v124 = vunpack.c.l.b16 %v43
  %v125 = vunpack.c.l.b16 %v44
  %v126 = vunpack.c.l.b16 %v45
  %v127 = vunpack.c.l.b16 %v46
  %v128 = vunpack.c.l.b16 %v47
  %v129 = vunpack.c.l.b16 %v48
  %v130 = vunpack.c.l.b16 %v49
  %v131 = vunpack.c.l.b16 %v50
  %v132 = vunpack.c.l.b16 %v51
  %v133 = vunpack.c.l.b16 %v52
  %v134 = vunpack.c.l.b16 %v53
  %v135 = vunpack.c.l.b16 %v54
  %v136 = vunpack.c.l.b16 %v55
  %v137 = vunpack.c.l.b16 %v56
  %v138 = vunpack.c.l.b16 %v57
  %v139 = vunpack.c.l.b16 %v58
  %v140 = vunpack.c.l.b16 %v59
  %v141 = vunpack.c.l.b16 %v60
  %v142 = vunpack.c.l.b16 %v61
  %v143 = vunpack.c.l.b16 %v62
  %v144 = vunpack.c.l.b16 %v63
  %v145 = vpack.c.b16 %v114, %v113
  %v146 = vpack.c.b16 %v116, %v115
  %v147 = vpack.c.b16 %v118, %v117
  %v148 = vpack.c.b16 %v120, %v119
  %v149 = vpack.c.b16 %v122, %v121
  %v150 = vpack.c.b16 %v124, %v123
  %v151 = vpack.c.b16 %v126, %v125
  %v152 = vpack.c.b16 %v128, %v127
  %v153 = vpack.c.b16 %v130, %v129
  %v154 = vpack.c.b16 %v132, %v131
  %v155 = vpack.c.b16 %v134, %v133
  %v156 = vpack.c.b16 %v136, %v135
  %v157 = vpack.c.b16 %v138, %v137
  %v158 = vpack.c.b16 %v140, %v139
  %v159 = vpack.c.b16 %v142, %v141
  %v160 = vpack.c.b16 %v144, %v143
  %177 = vmatprep.subr.bf16.mxu0 0
  %178 = vmatpush1.bf16.msra.mxu0 %v145
  %179 = vmatprep.subr.bf16.mxu0 0
  %180 = vmatpush1.bf16.msra.mxu0 %v146
  %181 = vmatprep.subr.bf16.mxu0 0
  %182 = vmatpush1.bf16.msra.mxu0 %v147
  %183 = vmatprep.subr.bf16.mxu0 0
  %184 = vmatpush1.bf16.msra.mxu0 %v148
  %185 = vmatprep.subr.bf16.mxu0 0
  %186 = vmatpush1.bf16.msra.mxu0 %v149
  %187 = vmatprep.subr.bf16.mxu0 0
  %188 = vmatpush1.bf16.msra.mxu0 %v150
  %189 = vmatprep.subr.bf16.mxu0 0
  %190 = vmatpush1.bf16.msra.mxu0 %v151
  %191 = vmatprep.subr.bf16.mxu0 0
  %192 = vmatpush1.bf16.msra.mxu0 %v152
  %193 = vmatprep.subr.bf16.mxu0 0
  %194 = vmatpush1.bf16.msra.mxu0 %v153
  %195 = vmatprep.subr.bf16.mxu0 0
  %196 = vmatpush1.bf16.msra.mxu0 %v154
  %197 = vmatprep.subr.bf16.mxu0 0
  %198 = vmatpush1.bf16.msra.mxu0 %v155
  %199 = vmatprep.subr.bf16.mxu0 0
  %200 = vmatpush1.bf16.msra.mxu0 %v156
  %201 = vmatprep.subr.bf16.mxu0 0
  %202 = vmatpush1.bf16.msra.mxu0 %v157
  %203 = vmatprep.subr.bf16.mxu0 0
  %204 = vmatpush1.bf16.msra.mxu0 %v158
  %205 = vmatprep.subr.bf16.mxu0 0
  %206 = vmatpush1.bf16.msra.mxu0 %v159
  %207 = vmatprep.subr.bf16.mxu0 0
  %208 = vmatpush1.bf16.msra.mxu0 %v160
  %209 = vmatprep.mubr.bf16.mxu0 %v78
  %210 = vmatmul.mubr.bf16.gmra.mrb[0].mxu0 %v77
  %v211 = vpop.f32.mrb[0].mxu0
  %v212 = vadd.f32 %v69, %v211
  %v213 = vpop.f32.mrb[0].mxu0
  %v214 = vpop.f32.mrb[0].mxu0
  %v215 = vadd.f32 %v69, %v214
  %v216 = vpop.f32.mrb[0].mxu0
  %217 = vdwg.mxu0
  %v218 = vmax.f32 %v212, 0.0
  %v219 = vmax.f32 %v215, 0.0
  %v220 = vpack.c.bf16 %v219, %v218
  %v221 = vld [vmem:[%s4] sm:$0xf]
  %v222 = vld [vmem:[%s4 + $0x4] sm:$0xf]
  %v223 = vld [vmem:[%s4 + $0x8] sm:$0xf]
  %v224 = vld [vmem:[%s4 + $0xc] sm:$0xf]
  %v225 = vld [vmem:[%s4 + $0x10] sm:$0xf]
  %v226 = vld [vmem:[%s4 + $0x14] sm:$0xf]
  %v227 = vld [vmem:[%s4 + $0x18] sm:$0xf]
  %v228 = vld [vmem:[%s4 + $0x1c] sm:$0xf]
  %v229 = vld [vmem:[%s4 + $0x20] sm:$0xf]
  %v230 = vld [vmem:[%s4 + $0x24] sm:$0xf]
  %v231 = vld [vmem:[%s4 + $0x28] sm:$0xf]
  %v232 = vld [vmem:[%s4 + $0x2c] sm:$0xf]
  %v233 = vld [vmem:[%s4 + $0x30] sm:$0xf]
  %v234 = vld [vmem:[%s4 + $0x34] sm:$0xf]
  %v235 = vld [vmem:[%s4 + $0x38] sm:$0xf]
  %v236 = vld [vmem:[%s4 + $0x3c] sm:$0xf]
  %v237 = vld [vmem:[%s5] sm:$0x1]
  %v239 = vlaneseq
  %v240 = vshrl.u32 %v239, 7
  %v241 = vsub.s32 0, %v240
  %v242 = vrot.slane %v237, %v241
  %v260 = vunpack.c.l.b16 %v221
  %v261 = vunpack.c.l.b16 %v222
  %v262 = vunpack.c.l.b16 %v223
  %v263 = vunpack.c.l.b16 %v224
  %v264 = vunpack.c.l.b16 %v225
  %v265 = vunpack.c.l.b16 %v226
  %v266 = vunpack.c.l.b16 %v227
  %v267 = vunpack.c.l.b16 %v228
  %v268 = vunpack.c.l.b16 %v229
  %v269 = vunpack.c.l.b16 %v230
  %v270 = vunpack.c.l.b16 %v231
  %v271 = vunpack.c.l.b16 %v232
  %v272 = vunpack.c.l.b16 %v233
  %v273 = vunpack.c.l.b16 %v234
  %v274 = vunpack.c.l.b16 %v235
  %v275 = vunpack.c.l.b16 %v236
  %v276 = vpack.c.b16 %v261, %v260
  %v277 = vpack.c.b16 %v263, %v262
  %v278 = vpack.c.b16 %v265, %v264
  %v279 = vpack.c.b16 %v267, %v266
  %v280 = vpack.c.b16 %v269, %v268
  %v281 = vpack.c.b16 %v271, %v270
  %v282 = vpack.c.b16 %v273, %v272
  %v283 = vpack.c.b16 %v275, %v274
  %292 = vmatprep.subr.bf16.mxu0 0
  %293 = vmatpush1.bf16.msra.mxu0 %v276
  %294 = vmatprep.subr.bf16.mxu0 0
  %295 = vmatpush1.bf16.msra.mxu0 %v277
  %296 = vmatprep.subr.bf16.mxu0 0
  %297 = vmatpush1.bf16.msra.mxu0 %v278
  %298 = vmatprep.subr.bf16.mxu0 0
  %299 = vmatpush1.bf16.msra.mxu0 %v279
  %300 = vmatprep.subr.bf16.mxu0 0
  %301 = vmatpush1.bf16.msra.mxu0 %v280
  %302 = vmatprep.subr.bf16.mxu0 0
  %303 = vmatpush1.bf16.msra.mxu0 %v281
  %304 = vmatprep.subr.bf16.mxu0 0
  %305 = vmatpush1.bf16.msra.mxu0 %v282
  %306 = vmatprep.subr.bf16.mxu0 0
  %307 = vmatpush1.bf16.msra.mxu0 %v283
  %308 = vmatprep.subr.bf16.mxu0 0
  %309 = vmatpush1.bf16.msra.mxu0 0
  %310 = vmatprep.subr.bf16.mxu0 0
  %311 = vmatpush1.bf16.msra.mxu0 0
  %312 = vmatprep.subr.bf16.mxu0 0
  %313 = vmatpush1.bf16.msra.mxu0 0
  %314 = vmatprep.subr.bf16.mxu0 0
  %315 = vmatpush1.bf16.msra.mxu0 0
  %316 = vmatprep.subr.bf16.mxu0 0
  %317 = vmatpush1.bf16.msra.mxu0 0
  %318 = vmatprep.subr.bf16.mxu0 0
  %319 = vmatpush1.bf16.msra.mxu0 0
  %320 = vmatprep.subr.bf16.mxu0 0
  %321 = vmatpush1.bf16.msra.mxu0 0
  %322 = vmatprep.subr.bf16.mxu0 0
  %323 = vmatpush1.bf16.msra.mxu0 0
  %324 = vmatprep.mubr.bf16.mxu0 0
  %325 = vmatmul.mubr.bf16.gmra.mrb[0].mxu0 %v220
  %v326 = vpop.f32.mrb[0].mxu0
  %v327 = vadd.f32 %v242, %v326
  %v328 = vpop.f32.mrb[0].mxu0
  %v329 = vpop.f32.mrb[0].mxu0
  %v330 = vadd.f32 %v242, %v329
  %v331 = vpop.f32.mrb[0].mxu0
  %332 = vdwg.mxu0
  %v333 = vmax.f32 %v327, 0.0
  %v334 = vmax.f32 %v330, 0.0
  %v335 = vpack.c.bf16 %v334, %v333
  %v336 = vld [vmem:[%s6] sm:$0xf]
  %v337 = vld [vmem:[%s6 + $0x4] sm:$0xf]
  %v338 = vld [vmem:[%s6 + $0x8] sm:$0xf]
  %v339 = vld [vmem:[%s6 + $0xc] sm:$0xf]
  %v340 = vld [vmem:[%s6 + $0x10] sm:$0xf]
  %v341 = vld [vmem:[%s6 + $0x14] sm:$0xf]
  %v342 = vld [vmem:[%s6 + $0x18] sm:$0xf]
  %v343 = vld [vmem:[%s6 + $0x1c] sm:$0xf]
  %v344 = vld [vmem:[%s6 + $0x20] sm:$0xf]
  %v345 = vld [vmem:[%s6 + $0x24] sm:$0xf]
  %v346 = vld [vmem:[%s6 + $0x28] sm:$0xf]
  %v347 = vld [vmem:[%s6 + $0x2c] sm:$0xf]
  %v348 = vld [vmem:[%s6 + $0x30] sm:$0xf]
  %v349 = vld [vmem:[%s6 + $0x34] sm:$0xf]
  %v350 = vld [vmem:[%s6 + $0x38] sm:$0xf]
  %v351 = vld [vmem:[%s6 + $0x3c] sm:$0xf]
  %v352 = vld [vmem:[%s7] sm:$0x1]
  %v354 = vlaneseq
  %v355 = vshrl.u32 %v354, 7
  %v356 = vsub.s32 0, %v355
  %v357 = vrot.slane %v352, %v356
  %v375 = vunpack.c.l.b16 %v336
  %v376 = vunpack.c.l.b16 %v337
  %v377 = vunpack.c.l.b16 %v338
  %v378 = vunpack.c.l.b16 %v339
  %v379 = vunpack.c.l.b16 %v340
  %v380 = vunpack.c.l.b16 %v341
  %v381 = vunpack.c.l.b16 %v342
  %v382 = vunpack.c.l.b16 %v343
  %v383 = vunpack.c.l.b16 %v344
  %v384 = vunpack.c.l.b16 %v345
  %v385 = vunpack.c.l.b16 %v346
  %v386 = vunpack.c.l.b16 %v347
  %v387 = vunpack.c.l.b16 %v348
  %v388 = vunpack.c.l.b16 %v349
  %v389 = vunpack.c.l.b16 %v350
  %v390 = vunpack.c.l.b16 %v351
  %v391 = vpack.c.b16 %v376, %v375
  %v392 = vpack.c.b16 %v378, %v377
  %v393 = vpack.c.b16 %v380, %v379
  %v394 = vpack.c.b16 %v382, %v381
  %v395 = vpack.c.b16 %v384, %v383
  %v396 = vpack.c.b16 %v386, %v385
  %v397 = vpack.c.b16 %v388, %v387
  %v398 = vpack.c.b16 %v390, %v389
  %407 = vmatprep.subr.bf16.mxu0 0
  %408 = vmatpush1.bf16.msra.mxu0 %v391
  %409 = vmatprep.subr.bf16.mxu0 0
  %410 = vmatpush1.bf16.msra.mxu0 %v392
  %411 = vmatprep.subr.bf16.mxu0 0
  %412 = vmatpush1.bf16.msra.mxu0 %v393
  %413 = vmatprep.subr.bf16.mxu0 0
  %414 = vmatpush1.bf16.msra.mxu0 %v394
  %415 = vmatprep.subr.bf16.mxu0 0
  %416 = vmatpush1.bf16.msra.mxu0 %v395
  %417 = vmatprep.subr.bf16.mxu0 0
  %418 = vmatpush1.bf16.msra.mxu0 %v396
  %419 = vmatprep.subr.bf16.mxu0 0
  %420 = vmatpush1.bf16.msra.mxu0 %v397
  %421 = vmatprep.subr.bf16.mxu0 0
  %422 = vmatpush1.bf16.msra.mxu0 %v398
  %423 = vmatprep.subr.bf16.mxu0 0
  %424 = vmatpush1.bf16.msra.mxu0 0
  %425 = vmatprep.subr.bf16.mxu0 0
  %426 = vmatpush1.bf16.msra.mxu0 0
  %427 = vmatprep.subr.bf16.mxu0 0
  %428 = vmatpush1.bf16.msra.mxu0 0
  %429 = vmatprep.subr.bf16.mxu0 0
  %430 = vmatpush1.bf16.msra.mxu0 0
  %431 = vmatprep.subr.bf16.mxu0 0
  %432 = vmatpush1.bf16.msra.mxu0 0
  %433 = vmatprep.subr.bf16.mxu0 0
  %434 = vmatpush1.bf16.msra.mxu0 0
  %435 = vmatprep.subr.bf16.mxu0 0
  %436 = vmatpush1.bf16.msra.mxu0 0
  %437 = vmatprep.subr.bf16.mxu0 0
  %438 = vmatpush1.bf16.msra.mxu0 0
  %439 = vmatprep.mubr.bf16.mxu0 0
  %440 = vmatmul.mubr.bf16.gmra.mrb[0].mxu0 %v335
  %v441 = vpop.f32.mrb[0].mxu0
  %v442 = vadd.f32 %v357, %v441
  %v443 = vpop.f32.mrb[0].mxu0
  %v444 = vpop.f32.mrb[0].mxu0
  %v445 = vadd.f32 %v357, %v444
  %v446 = vpop.f32.mrb[0].mxu0
  %447 = vdwg.mxu0
  %vm448 = vcmask 39936
  %v449 = vsel %vm448, %v442, -inf
  %450 = vmax.xlane.f32.xlu0 %v449
  %v451 = vpop.xlane.xlu0 %450
  %v452 = vsel %vm448, %v445, -inf
  %453 = vmax.xlane.f32.xlu0 %v452
  %v454 = vpop.xlane.xlu0 %453
  %v455 = vsub.f32 %v442, %v451
  %v456 = vsub.f32 %v445, %v454
  %v457 = vmul.f32 %v455, 1.442695
  %v458 = vpow.pop %v457
  %v459 = vmul.f32 %v456, 1.442695
  %v460 = vpow.pop %v459
  %v461 = vsel %vm448, %v458, 0.0
  %462 = vadd.xlane.f32.xlu0 %v461
  %v463 = vpop.xlane.xlu0 %462
  %v464 = vsel %vm448, %v460, 0.0
  %465 = vadd.xlane.f32.xlu0 %v464
  %v466 = vpop.xlane.xlu0 %465
  %v467 = vrcp.pop %v463
  %v468 = vrcp.pop %v466
  %v469 = vmul.f32 %v458, %v467
  %v470 = vmul.f32 %v460, %v468
  %v471 = vld [vmem:[%s1] sm:$0xff]
  %v472 = vld [vmem:[%s1 + $0x8] sm:$0xff]
  %475 = vrot.lane.b32.xlu0 %v471, 2
  %v476 = vpop.permute.xlu0 %475
  %477 = vrot.lane.b32.xlu0 %v472, 2
  %v478 = vpop.permute.xlu0 %477
  %v481 = vsub.f32 %v471, %v476
  %v482 = vsub.f32 %v472, %v478
  %v483 = vmul.f32 %v481, 0.5
  %v484 = vmul.f32 %v482, 0.5
  %487 = vrot.lane.b32.xlu0 %v483, 126
  %v488 = vpop.permute.xlu0 %487
  %489 = vrot.lane.b32.xlu0 %v484, 126
  %v490 = vpop.permute.xlu0 %489
  %v493 = vadd.f32 %v471, %v488
  %v494 = vadd.f32 %v472, %v490
  %v495 = vrcp.pop 10.0
  %v496 = vmul.f32 %v442, %v495
  %v497 = vmul.f32 %v445, %v495
  %v498 = vrcp.pop 5.0
  %v499 = vmul.f32 %v442, %v498
  %v500 = vmul.f32 %v445, %v498
  %v501 = vmin.f32 %v499, 4.1351666
  %v502 = vmin.f32 %v500, 4.1351666
  %504 = vset.pattern.permute.xlu0 2
  %505 = vperm.xlu0 %504, %v481
  %v506 = vpop.permute.xlu0 %505
  %509 = vset.pattern.permute.xlu0 2
  %510 = vperm.xlu0 %509, %v482
  %v511 = vpop.permute.xlu0 %510
  %v513 = vmul.f32 %v496, %v506
  %v514 = vmul.f32 %v497, %v511
  %516 = vset.pattern.permute.xlu0 0
  %517 = vperm.xlu0 %516, %v493
  %v518 = vpop.permute.xlu0 %517
  %521 = vset.pattern.permute.xlu0 0
  %522 = vperm.xlu0 %521, %v494
  %v523 = vpop.permute.xlu0 %522
  %v525 = vadd.f32 %v513, %v518
  %v526 = vadd.f32 %v514, %v523
  %527 = vset.pattern.permute.xlu0 3
  %528 = vperm.xlu0 %527, %v481
  %v529 = vpop.permute.xlu0 %528
  %531 = vset.pattern.permute.xlu0 3
  %532 = vperm.xlu0 %531, %v482
  %v533 = vpop.permute.xlu0 %532
  %v535 = vmul.f32 %v496, %v529
  %v536 = vmul.f32 %v497, %v533
  %537 = vset.pattern.permute.xlu0 1
  %538 = vperm.xlu0 %537, %v493
  %v539 = vpop.permute.xlu0 %538
  %541 = vset.pattern.permute.xlu0 1
  %542 = vperm.xlu0 %541, %v494
  %v543 = vpop.permute.xlu0 %542
  %v545 = vadd.f32 %v535, %v539
  %v546 = vadd.f32 %v536, %v543
  %v547 = vmul.f32 %v501, 1.442695
  %v548 = vpow.pop %v547
  %v549 = vmul.f32 %v502, 1.442695
  %v550 = vpow.pop %v549
  %v551 = vmul.f32 %v548, %v506
  %v552 = vmul.f32 %v550, %v511
  %v553 = vmul.f32 %v548, %v529
  %v554 = vmul.f32 %v550, %v533
  %v555 = vmul.f32 %v551, 0.5
  %v556 = vmul.f32 %v552, 0.5
  %559 = vrot.lane.b32.xlu0 %v555, 118
  %v560 = vpop.permute.xlu0 %559
  %561 = vrot.lane.b32.xlu0 %v556, 118
  %v562 = vpop.permute.xlu0 %561
  %v565 = vsub.f32 %v525, %v560
  %v566 = vsub.f32 %v526, %v562
  %v567 = vmax.f32 %v565, 0.0
  %v568 = vmax.f32 %v566, 0.0
  %569 = vset.pattern.permute.xlu0 5
  %570 = vperm.xlu0 %569, %v471
  %v571 = vpop.permute.xlu0 %570
  %573 = vset.pattern.permute.xlu0 5
  %574 = vperm.xlu0 %573, %v472
  %v575 = vpop.permute.xlu0 %574
  %v577 = vmin.f32 %v571, %v567
  %v578 = vmin.f32 %v575, %v568
  %v579 = vmul.f32 %v553, 0.5
  %v580 = vmul.f32 %v554, 0.5
  %583 = vrot.lane.b32.xlu0 %v579, 118
  %v584 = vpop.permute.xlu0 %583
  %585 = vrot.lane.b32.xlu0 %v580, 118
  %v586 = vpop.permute.xlu0 %585
  %v589 = vsub.f32 %v545, %v584
  %v590 = vsub.f32 %v546, %v586
  %v591 = vmax.f32 %v589, 0.0
  %v592 = vmax.f32 %v590, 0.0
  %593 = vset.pattern.permute.xlu0 4
  %594 = vperm.xlu0 %593, %v471
  %v595 = vpop.permute.xlu0 %594
  %597 = vset.pattern.permute.xlu0 4
  %598 = vperm.xlu0 %597, %v472
  %v599 = vpop.permute.xlu0 %598
  %v601 = vmin.f32 %v595, %v591
  %v602 = vmin.f32 %v599, %v592
  %v603 = vadd.f32 %v525, %v560
  %v604 = vadd.f32 %v526, %v562
  %v605 = vmax.f32 %v603, 0.0
  %v606 = vmax.f32 %v604, 0.0
  %v607 = vmin.f32 %v571, %v605
  %v608 = vmin.f32 %v575, %v606
  %v609 = vadd.f32 %v545, %v584
  %v610 = vadd.f32 %v546, %v586
  %v611 = vmax.f32 %v609, 0.0
  %v612 = vmax.f32 %v610, 0.0
  %v613 = vmin.f32 %v595, %v611
  %v614 = vmin.f32 %v599, %v612
  %615 = vst [vmem:[%s8] sm:$0xff] 0.0
  %616 = vst [vmem:[%s8 + $0x8] sm:$0xff] 0.0
  %617 = vst.msk [vmem:[%s8] sm:$0xff] %vm448, %v469
  %618 = vst.msk [vmem:[%s8 + $0x8] sm:$0xff] %vm448, %v470
  %vm619 = vcmask 80936
  %620 = vst.msk [vmem:[%s8] sm:$0xff] %vm619, %v577
  %621 = vst.msk [vmem:[%s8 + $0x8] sm:$0xff] %vm619, %v578
  %vm622 = vcmask 121936
  %623 = vst.msk [vmem:[%s8] sm:$0xff] %vm622, %v601
  %624 = vst.msk [vmem:[%s8 + $0x8] sm:$0xff] %vm622, %v602
  %627 = vrot.lane.b32.xlu0 %v607, 10
  %v628 = vpop.permute.xlu0 %627
  %629 = vrot.lane.b32.xlu0 %v608, 10
  %v630 = vpop.permute.xlu0 %629
  %vm633 = vcmask 162936
  %634 = vst.msk [vmem:[%s8] sm:$0xff] %vm633, %v628
  %635 = vst.msk [vmem:[%s8 + $0x8] sm:$0xff] %vm633, %v630
  %638 = vrot.lane.b32.xlu0 %v613, 10
  %v639 = vpop.permute.xlu0 %638
  %640 = vrot.lane.b32.xlu0 %v614, 10
  %v641 = vpop.permute.xlu0 %640
  %vm644 = vcmask 203936
  %645 = vst.msk [vmem:[%s8] sm:$0xff] %vm644, %v639
  %646 = vst.msk [vmem:[%s8 + $0x8] sm:$0xff] %vm644, %v641
  // Predicated region
  $region34: #{_device_forward.1} parent=0 // pred_check
    _
  $region35: #{_device_forward.1} parent=0 // pred_check_branch
    %648 = sbr.rel (0) target = $region37
  $region36: #{_device_forward.1} parent=0 // pred_region
    _
  $region37: #{_device_forward.1} parent=0 // pred_fallthru
    _
  // Predicated region
  $region38: #{_device_forward.1} parent=0 // pred_check
    _
  $region39: #{_device_forward.1} parent=0 // pred_check_branch
    %650 = sbr.rel (0) target = $region41
  $region40: #{_device_forward.1} parent=0 // pred_region
    _
  $region41: #{_device_forward.1} parent=0 // pred_fallthru
    _

</llo_original>
